<compile_context>
chip_gen: v5e
topology: v5e:2x2
jax: 0.10.0
libtpu: 0.0.40
codegen_flags: <defaults>
</compile_context>

<pallas_src>
import jax
import jax.numpy as jnp
from jax import lax
from jax.experimental import pallas as pl
from jax.experimental.pallas import tpu as pltpu


def _pick_tq(hw):
    for t in (512, 384, 256, 128):
        if hw % t == 0:
            return t
    # TODO(synk): HW with no multiple-of-128 divisor would need q-axis padding/masking.
    return hw


def nonlocal_block_2d(x_nchw, kparams, tq=None):
    """Embedded-gaussian non-local block forward (eval mode).

    x_nchw: (B, C, H, W) float32. kparams: output of pack_kernel_params().
    Returns z with the same shape as x_nchw.
    """
    B, C, H, W = x_nchw.shape
    HW = H * W
    Ci = (kparams["w_qkv"].shape[0] - 1) // 3
    TQ = _pick_tq(HW) if tq is None else tq
    assert HW % TQ == 0, "H*W must be divisible by the query tile"
    NQ = HW // TQ

    # NCHW -> (B, C, HW): pure reshape, no HBM transpose. Lane dim = HW (>=128).
    x_flat = x_nchw.reshape(B, C, HW)

    def kernel(x_ref, wqkv_ref, bqkv_ref, ww_ref, bw_ref, z_ref,
               thT_scr, ph_scr, ga_scr):
        q = pl.program_id(1)

        # ---- prologue: once per batch element, fused QKV projection of the full image.
        @pl.when(q == 0)
        def _():
            x_bf = x_ref[...].astype(jnp.bfloat16)                       # (C, HW)
            qkv = jnp.dot(wqkv_ref[...], x_bf,
                          preferred_element_type=jnp.float32)            # (3Ci+1, HW)
            qkv = qkv + bqkv_ref[...]                                    # f32 bias add
            thT_scr[...] = qkv[0:Ci, :].T.astype(jnp.bfloat16)           # (HW, Ci)
            ph_scr[...] = qkv[Ci:2 * Ci, :].astype(jnp.bfloat16)         # (Ci, HW)
            # rows 2Ci..3Ci are g; the extra row is 0*x + 1 == 1 (softmax denominator).
            ga_scr[...] = qkv[2 * Ci:, :].astype(jnp.bfloat16)           # (Ci+1, HW)

        qs = pl.multiple_of(q * TQ, TQ)

        # ---- attention slab for TQ query positions (bf16 MXU, f32 accumulation).
        th = thT_scr[pl.ds(qs, TQ), :]                                   # (TQ, Ci) bf16
        f = jnp.dot(th, ph_scr[...], preferred_element_type=jnp.float32)  # (TQ, HW) f32
        m = jnp.max(f, axis=-1, keepdims=True)
        p = jnp.exp(f - m)                                               # f32 exp (v5e-safe)
        p_bf = p.astype(jnp.bfloat16)

        # y_aug = [g ; 1] @ p^T : rows 0..Ci-1 = unnormalized y, row Ci = softmax row-sum.
        y_aug = lax.dot_general(ga_scr[...], p_bf,
                                dimension_numbers=(((1,), (1,)), ((), ())),
                                preferred_element_type=jnp.float32)      # (Ci+1, TQ)
        inv = pl.reciprocal(y_aug[Ci:Ci + 1, :], approx=True)            # (1, TQ)
        y = (y_aug[0:Ci, :] * inv).astype(jnp.bfloat16)                  # (Ci, TQ)

        # W (1x1 conv, BN folded) + residual, written lane-dense in (C, TQ).
        w_y = jnp.dot(ww_ref[...], y, preferred_element_type=jnp.float32) + bw_ref[...]
        x_slab = x_ref[:, pl.ds(qs, TQ)]                                 # (C, TQ) f32
        z_ref[...] = (w_y + x_slab).astype(z_ref.dtype)

    full = lambda shape: pl.BlockSpec(shape, lambda b, q: (0, 0))

    # VMEM budget (bytes): double-buffered I/O blocks + resident scratch + slab temps.
    est = (2 * (C * HW * 4 + C * TQ * 4
                + ((3 * Ci + 1) * C + C * Ci) * 2 + (3 * Ci + 1 + C) * 4)
           + (HW * Ci + Ci * HW + (Ci + 1) * HW) * 2
           + 3 * TQ * HW * 4 + 2 * (3 * Ci + 1) * HW * 4)
    vmem_limit = int(min(64 * 1024 * 1024, 2 * est + 8 * 1024 * 1024))

    flops = B * (2 * (3 * Ci + 1) * C * HW       # fused QKV projection
                 + 2 * HW * Ci * HW              # f = theta @ phi
                 + 2 * (Ci + 1) * HW * HW        # y (+ denom) = [g;1] @ p^T
                 + 2 * C * Ci * HW)              # W conv
    cost = pl.CostEstimate(
        flops=int(flops),
        transcendentals=int(B * (HW * HW + HW)),
        bytes_accessed=int(2 * B * C * HW * 4
                           + ((3 * Ci + 1) * C + C * Ci) * 2
                           + (3 * Ci + 1 + C) * 4))

    z_flat = pl.pallas_call(
        kernel,
        out_shape=jax.ShapeDtypeStruct((B, C, HW), x_nchw.dtype),
        grid_spec=pltpu.PrefetchScalarGridSpec(
            num_scalar_prefetch=0,
            grid=(B, NQ),
            in_specs=[
                pl.BlockSpec((None, C, HW), lambda b, q: (b, 0, 0)),  # x: resident per batch
                full((3 * Ci + 1, C)),                                # fused QKV weight (bf16)
                full((3 * Ci + 1, 1)),                                # fused QKV bias  (f32)
                full((C, Ci)),                                        # W weight, BN folded (bf16)
                full((C, 1)),                                         # W bias,   BN folded (f32)
            ],
            out_specs=pl.BlockSpec((None, C, TQ), lambda b, q: (b, 0, q)),
            scratch_shapes=[
                pltpu.VMEM((HW, Ci), jnp.bfloat16),      # theta^T (all positions)
                pltpu.VMEM((Ci, HW), jnp.bfloat16),      # phi
                pltpu.VMEM((Ci + 1, HW), jnp.bfloat16),  # [g ; ones]
            ],
        ),
        compiler_params=pltpu.CompilerParams(
            dimension_semantics=("parallel", "arbitrary"),
            vmem_limit_bytes=vmem_limit),
        cost_estimate=cost,
    )(x_flat, kparams["w_qkv"], kparams["b_qkv"], kparams["w_w"], kparams["b_w"])

    return z_flat.reshape(B, C, H, W)


def make_params(key, in_channels, inter_channels=None):
    """PyTorch-style init mirroring the module __init__ (BN gamma/beta = 0)."""
    C = in_channels
    Ci = inter_channels if inter_channels is not None else max(C // 2, 1)
    ks = jax.random.split(key, 8)
    bound_in = 1.0 / (C ** 0.5)      # fan_in for theta/phi/g 1x1 convs
    bound_ci = 1.0 / (Ci ** 0.5)     # fan_in for W conv

    def u(k, shape, bound):
        return jax.random.uniform(k, shape, jnp.float32, -bound, bound)

    return dict(
        w_theta=u(ks[0], (Ci, C), bound_in), b_theta=u(ks[1], (Ci,), bound_in),
        w_phi=u(ks[2], (Ci, C), bound_in),   b_phi=u(ks[3], (Ci,), bound_in),
        w_g=u(ks[4], (Ci, C), bound_in),     b_g=u(ks[5], (Ci,), bound_in),
        w_w=u(ks[6], (C, Ci), bound_ci),     b_w=u(ks[7], (C,), bound_ci),
        gamma=jnp.zeros((C,), jnp.float32), beta=jnp.zeros((C,), jnp.float32),
        mean=jnp.zeros((C,), jnp.float32), var=jnp.ones((C,), jnp.float32),
        eps=1e-5,
    )


def pack_kernel_params(p):
    """Fold eval-mode BN into the W conv, fuse theta/phi/g plus a constant 'ones'
    row (softmax denominator trick) into one QKV weight, cast MXU weights to bf16."""
    C, Ci = p["w_w"].shape
    w_qkv = jnp.concatenate(
        [p["w_theta"], p["w_phi"], p["w_g"], jnp.zeros((1, C), jnp.float32)], axis=0)
    b_qkv = jnp.concatenate(
        [p["b_theta"], p["b_phi"], p["b_g"], jnp.ones((1,), jnp.float32)])
    scale = p["gamma"] / jnp.sqrt(p["var"] + p["eps"])
    w_w_eff = p["w_w"] * scale[:, None]
    b_w_eff = scale * (p["b_w"] - p["mean"]) + p["beta"]
    return dict(
        w_qkv=w_qkv.astype(jnp.bfloat16),
        b_qkv=b_qkv.reshape(-1, 1).astype(jnp.float32),
        w_w=w_w_eff.astype(jnp.bfloat16),
        b_w=b_w_eff.reshape(-1, 1).astype(jnp.float32),
    )


def reference_nonlocal(x_nchw, p):
    """Pure-JAX f32 reference mirroring the PyTorch forward (for verification)."""
    B, C, H, W = x_nchw.shape
    HW = H * W
    xf = x_nchw.reshape(B, C, HW)

    def conv1x1(w, b):  # w: (Cout, Cin), b: (Cout,)
        return jnp.einsum("oc,bch->boh", w, xf) + b[None, :, None]

    theta = conv1x1(p["w_theta"], p["b_theta"])       # (B, Ci, HW)
    phi = conv1x1(p["w_phi"], p["b_phi"])             # (B, Ci, HW)
    g = conv1x1(p["w_g"], p["b_g"])                   # (B, Ci, HW)
    f = jnp.einsum("bci,bcj->bij", theta, phi)        # (B, HW, HW)
    a = jax.nn.softmax(f, axis=-1)
    y = jnp.einsum("bij,bcj->bci", a, g)              # (B, Ci, HW)
    scale = p["gamma"] / jnp.sqrt(p["var"] + p["eps"])
    w_eff = p["w_w"] * scale[:, None]
    b_eff = scale * (p["b_w"] - p["mean"]) + p["beta"]
    wy = jnp.einsum("oc,bci->boi", w_eff, y) + b_eff[None, :, None]
    return wy.reshape(B, C, H, W) + x_nchw


if __name__ == "__main__":
    B, C, H, W = 2, 4, 16, 16
    inter = max(C // 2, 1)            # inter_channels default = in_channels // 2

    key = jax.random.PRNGKey(0)
    k_x, k_p = jax.random.split(key)
    x = jax.random.normal(k_x, (B, C, H, W), jnp.float32)
    params = make_params(k_p, C, inter)

    # 1) Module as-initialized: BN gamma/beta = 0  =>  z must equal x exactly.
    #    tq=128 forces 2 q-tiles per batch so the prologue/tiling path is exercised.
    z = nonlocal_block_2d(x, pack_kernel_params(params), tq=128)
    z = jax.block_until_ready(z)
    assert z.shape == (B, C, H, W)
    assert jnp.allclose(z, x, atol=1e-6), "residual-init property violated"

    # 2) Non-degenerate W path (BN gamma=1) to exercise the full attention math.
    #    Tolerance is loose because the kernel uses bf16 MXU operands + approx recip.
    params_t = dict(params, gamma=jnp.ones((C,), jnp.float32))
    z_t = jax.block_until_ready(nonlocal_block_2d(x, pack_kernel_params(params_t), tq=128))
    z_ref = reference_nonlocal(x, params_t)
    assert jnp.allclose(z_t, z_ref, atol=5e-2, rtol=5e-2), "mismatch vs JAX reference"

    print("KERNEL_OK")
</pallas_src>

<mosaic_0001>
module attributes {stable_mosaic.version = 11 : i64} {
  func.func @kernel(%arg0: i32, %arg1: i32, %arg2: memref<1x4x256xf32, #tpu.memory_space<vmem>>, %arg3: memref<7x4xbf16, #tpu.memory_space<vmem>>, %arg4: memref<7x1xf32, #tpu.memory_space<vmem>>, %arg5: memref<4x2xbf16, #tpu.memory_space<vmem>>, %arg6: memref<4x1xf32, #tpu.memory_space<vmem>>, %arg7: memref<1x4x128xf32, #tpu.memory_space<vmem>>, %arg8: memref<256x2xbf16, #tpu.memory_space<vmem>>, %arg9: memref<2x256xbf16, #tpu.memory_space<vmem>>, %arg10: memref<3x256xbf16, #tpu.memory_space<vmem>>) attributes {dimension_semantics = [#tpu.dimension_semantics<parallel>, #tpu.dimension_semantics<arbitrary>], iteration_bounds = array<i64: 2, 2>, scalar_prefetch = 0 : i64, scratch_operands = 3 : i64, tpu.core_type = #tpu.core_type<tc>, window_params = [{transform_indices = @transform_0, window_bounds = array<i64: 1, 4, 256>}, {pipeline_mode = #tpu.pipeline_mode<synchronous>, transform_indices = @transform_1, window_bounds = array<i64: 7, 4>}, {pipeline_mode = #tpu.pipeline_mode<synchronous>, transform_indices = @transform_2, window_bounds = array<i64: 7, 1>}, {pipeline_mode = #tpu.pipeline_mode<synchronous>, transform_indices = @transform_3, window_bounds = array<i64: 4, 2>}, {pipeline_mode = #tpu.pipeline_mode<synchronous>, transform_indices = @transform_4, window_bounds = array<i64: 4, 1>}, {transform_indices = @transform_5, window_bounds = array<i64: 1, 4, 128>}]} {
    %c0_i32 = arith.constant 0 : i32
    %0 = arith.cmpi eq, %arg1, %c0_i32 : i32
    %1 = arith.extui %0 : i1 to i32
    %c0_i32_0 = arith.constant 0 : i32
    %2 = arith.cmpi ne, %1, %c0_i32_0 : i32
    scf.if %2 {
      %c0_17 = arith.constant 0 : index
      %c0_18 = arith.constant 0 : index
      %c0_19 = arith.constant 0 : index
      %35 = vector.load %arg2[%c0_17, %c0_18, %c0_19] : memref<1x4x256xf32, #tpu.memory_space<vmem>>, vector<1x4x256xf32>
      %36 = vector.shape_cast %35 : vector<1x4x256xf32> to vector<4x256xf32>
      %37 = arith.truncf %36 : vector<4x256xf32> to vector<4x256xbf16>
      %c0_20 = arith.constant 0 : index
      %c0_21 = arith.constant 0 : index
      %38 = vector.load %arg3[%c0_20, %c0_21] : memref<7x4xbf16, #tpu.memory_space<vmem>>, vector<7x4xbf16>
      %cst_22 = arith.constant dense<0.000000e+00> : vector<7x256xf32>
      %39 = tpu.matmul %38, %37, %cst_22 {dimension_numbers = #tpu.dot_dimension_numbers<[1], [0], [0], [1], [0, 0, 1, 1], [], []>} : vector<7x4xbf16>, vector<4x256xbf16>, vector<7x256xf32> -> vector<7x256xf32>
      %c0_23 = arith.constant 0 : index
      %c0_24 = arith.constant 0 : index
      %40 = vector.load %arg4[%c0_23, %c0_24] : memref<7x1xf32, #tpu.memory_space<vmem>>, vector<7x1xf32>
      %41 = vector.broadcast %40 : vector<7x1xf32> to vector<7x256xf32>
      %42 = arith.addf %39, %41 : vector<7x256xf32>
      %43 = vector.extract_strided_slice %42 {offsets = [0, 0], sizes = [2, 256], strides = [1, 1]} : vector<7x256xf32> to vector<2x256xf32>
      %44 = tpu.transpose %43, [1, 0] : vector<2x256xf32> -> vector<256x2xf32>
      %45 = arith.truncf %44 : vector<256x2xf32> to vector<256x2xbf16>
      %c0_25 = arith.constant 0 : index
      %c0_26 = arith.constant 0 : index
      %46 = vector.load %arg8[%c0_25, %c0_26] : memref<256x2xbf16, #tpu.memory_space<vmem>>, vector<256x2xbf16>
      tpu.vector_store %arg8[%c0_25, %c0_26], %45 {strides = array<i32>} : memref<256x2xbf16, #tpu.memory_space<vmem>>, vector<256x2xbf16>,
      %47 = vector.extract_strided_slice %42 {offsets = [2, 0], sizes = [2, 256], strides = [1, 1]} : vector<7x256xf32> to vector<2x256xf32>
      %48 = arith.truncf %47 : vector<2x256xf32> to vector<2x256xbf16>
      %c0_27 = arith.constant 0 : index
      %c0_28 = arith.constant 0 : index
      %49 = vector.load %arg9[%c0_27, %c0_28] : memref<2x256xbf16, #tpu.memory_space<vmem>>, vector<2x256xbf16>
      tpu.vector_store %arg9[%c0_27, %c0_28], %48 {strides = array<i32>} : memref<2x256xbf16, #tpu.memory_space<vmem>>, vector<2x256xbf16>,
      %50 = vector.extract_strided_slice %42 {offsets = [4, 0], sizes = [3, 256], strides = [1, 1]} : vector<7x256xf32> to vector<3x256xf32>
      %51 = arith.truncf %50 : vector<3x256xf32> to vector<3x256xbf16>
      %c0_29 = arith.constant 0 : index
      %c0_30 = arith.constant 0 : index
      %52 = vector.load %arg10[%c0_29, %c0_30] : memref<3x256xbf16, #tpu.memory_space<vmem>>, vector<3x256xbf16>
      tpu.vector_store %arg10[%c0_29, %c0_30], %51 {strides = array<i32>} : memref<3x256xbf16, #tpu.memory_space<vmem>>, vector<3x256xbf16>,
    } else {
    }
    %c128_i32 = arith.constant 128 : i32
    %3 = arith.muli %arg1, %c128_i32 : i32
    %4 = tpu.assume_multiple %3, 128 : i32
    %5 = arith.index_cast %4 : i32 to index
    %c0 = arith.constant 0 : index
    %6 = vector.load %arg8[%5, %c0] : memref<256x2xbf16, #tpu.memory_space<vmem>>, vector<128x2xbf16>
    %c0_1 = arith.constant 0 : index
    %c0_2 = arith.constant 0 : index
    %7 = vector.load %arg9[%c0_1, %c0_2] : memref<2x256xbf16, #tpu.memory_space<vmem>>, vector<2x256xbf16>
    %cst = arith.constant dense<0.000000e+00> : vector<128x256xf32>
    %8 = tpu.matmul %6, %7, %cst {dimension_numbers = #tpu.dot_dimension_numbers<[1], [0], [0], [1], [0, 0, 1, 1], [], []>} : vector<128x2xbf16>, vector<2x256xbf16>, vector<128x256xf32> -> vector<128x256xf32>
    %cst_3 = arith.constant dense<0xFF800000> : vector<128xf32>
    %9 = vector.multi_reduction <maximumf>, %8, %cst_3 [1] : vector<128x256xf32> to vector<128xf32>
    %10 = vector.shape_cast %9 : vector<128xf32> to vector<128x1xf32>
    %11 = vector.broadcast %10 : vector<128x1xf32> to vector<128x256xf32>
    %12 = arith.subf %8, %11 : vector<128x256xf32>
    %13 = math.exp %12 : vector<128x256xf32>
    %14 = arith.truncf %13 : vector<128x256xf32> to vector<128x256xbf16>
    %c0_4 = arith.constant 0 : index
    %c0_5 = arith.constant 0 : index
    %15 = vector.load %arg10[%c0_4, %c0_5] : memref<3x256xbf16, #tpu.memory_space<vmem>>, vector<3x256xbf16>
    %cst_6 = arith.constant dense<0.000000e+00> : vector<3x128xf32>
    %16 = tpu.matmul %15, %14, %cst_6 {dimension_numbers = #tpu.dot_dimension_numbers<[1], [1], [0], [0], [0, 0, 1, 0], [], []>} : vector<3x256xbf16>, vector<128x256xbf16>, vector<3x128xf32> -> vector<3x128xf32>
    %17 = vector.extract_strided_slice %16 {offsets = [2, 0], sizes = [1, 128], strides = [1, 1]} : vector<3x128xf32> to vector<1x128xf32>
    %18 = tpu.reciprocal %17 {approx = true} : vector<1x128xf32> -> vector<1x128xf32>
    %19 = vector.extract_strided_slice %16 {offsets = [0, 0], sizes = [2, 128], strides = [1, 1]} : vector<3x128xf32> to vector<2x128xf32>
    %20 = vector.broadcast %18 : vector<1x128xf32> to vector<2x128xf32>
    %21 = arith.mulf %19, %20 : vector<2x128xf32>
    %22 = arith.truncf %21 : vector<2x128xf32> to vector<2x128xbf16>
    %c0_7 = arith.constant 0 : index
    %c0_8 = arith.constant 0 : index
    %23 = vector.load %arg5[%c0_7, %c0_8] : memref<4x2xbf16, #tpu.memory_space<vmem>>, vector<4x2xbf16>
    %cst_9 = arith.constant dense<0.000000e+00> : vector<4x128xf32>
    %24 = tpu.matmul %23, %22, %cst_9 {dimension_numbers = #tpu.dot_dimension_numbers<[1], [0], [0], [1], [0, 0, 1, 1], [], []>} : vector<4x2xbf16>, vector<2x128xbf16>, vector<4x128xf32> -> vector<4x128xf32>
    %c0_10 = arith.constant 0 : index
    %c0_11 = arith.constant 0 : index
    %25 = vector.load %arg6[%c0_10, %c0_11] : memref<4x1xf32, #tpu.memory_space<vmem>>, vector<4x1xf32>
    %26 = vector.broadcast %25 : vector<4x1xf32> to vector<4x128xf32>
    %27 = arith.addf %24, %26 : vector<4x128xf32>
    %c0_12 = arith.constant 0 : index
    %c0_13 = arith.constant 0 : index
    %28 = arith.index_cast %4 : i32 to index
    %29 = vector.load %arg2[%c0_12, %c0_13, %28] : memref<1x4x256xf32, #tpu.memory_space<vmem>>, vector<1x4x128xf32>
    %30 = vector.shape_cast %29 : vector<1x4x128xf32> to vector<4x128xf32>
    %31 = arith.addf %27, %30 : vector<4x128xf32>
    %c0_14 = arith.constant 0 : index
    %c0_15 = arith.constant 0 : index
    %c0_16 = arith.constant 0 : index
    %32 = vector.load %arg7[%c0_14, %c0_15, %c0_16] : memref<1x4x128xf32, #tpu.memory_space<vmem>>, vector<1x4x128xf32>
    %33 = vector.shape_cast %32 : vector<1x4x128xf32> to vector<4x128xf32>
    %34 = vector.shape_cast %31 : vector<4x128xf32> to vector<1x4x128xf32>
    tpu.vector_store %arg7[%c0_14, %c0_15, %c0_16], %34 {strides = array<i32>} : memref<1x4x128xf32, #tpu.memory_space<vmem>>, vector<1x4x128xf32>,
    return
  }
  func.func @transform_0(%arg0: i32, %arg1: i32) -> (i32, i32, i32) {
    %c0_i32 = arith.constant 0 : i32
    %c0_i32_0 = arith.constant 0 : i32
    %c0_i32_1 = arith.constant 0 : i32
    return %arg0, %c0_i32, %c0_i32_0 : i32, i32, i32
  }
  func.func @transform_1(%arg0: i32, %arg1: i32) -> (i32, i32) {
    %c0_i32 = arith.constant 0 : i32
    %c0_i32_0 = arith.constant 0 : i32
    %c0_i32_1 = arith.constant 0 : i32
    return %c0_i32, %c0_i32_0 : i32, i32
  }
  func.func @transform_2(%arg0: i32, %arg1: i32) -> (i32, i32) {
    %c0_i32 = arith.constant 0 : i32
    %c0_i32_0 = arith.constant 0 : i32
    %c0_i32_1 = arith.constant 0 : i32
    return %c0_i32, %c0_i32_0 : i32, i32
  }
  func.func @transform_3(%arg0: i32, %arg1: i32) -> (i32, i32) {
    %c0_i32 = arith.constant 0 : i32
    %c0_i32_0 = arith.constant 0 : i32
    %c0_i32_1 = arith.constant 0 : i32
    return %c0_i32, %c0_i32_0 : i32, i32
  }
  func.func @transform_4(%arg0: i32, %arg1: i32) -> (i32, i32) {
    %c0_i32 = arith.constant 0 : i32
    %c0_i32_0 = arith.constant 0 : i32
    %c0_i32_1 = arith.constant 0 : i32
    return %c0_i32, %c0_i32_0 : i32, i32
  }
  func.func @transform_5(%arg0: i32, %arg1: i32) -> (i32, i32, i32) {
    %c0_i32 = arith.constant 0 : i32
    %c0_i32_0 = arith.constant 0 : i32
    return %arg0, %c0_i32, %arg1 : i32, i32, i32
  }
}

</mosaic_0001>

<llo_original>
// kernel: tpu_custom_call.1
$region0: #{tpu_custom_call.1}
  #allocation0 [shape = 'u32[]', space=smem, size = 0x4, offset = 0x4, fixed_abs, tag = 'smem constant byte address 0x4 - core index']
  #allocation1 [shape = 'u32[72,128]{1,0:T(1,128)}', space=vmem, size = 0x9000, scoped, tag = 'internal scratch']
  #allocation2 [shape = 'bf16[256,2]{1,0:T(8,128)(2,1)}', space=vmem, size = 0x10000, scoped, tag = 'scratch operand']
  #allocation3 [shape = 'bf16[2,256]{1,0:T(2,128)(2,1)}', space=vmem, size = 0x400, scoped, tag = 'scratch operand']
  #allocation4 [shape = 'bf16[3,256]{1,0:T(4,128)(2,1)}', space=vmem, size = 0x800, scoped, tag = 'scratch operand']
  %s0 = inlined_call_operand.hbm [shape: f32[2,4,256], index: 0, kind: input, shape index: {}]
  %s1 = inlined_call_operand.vmem [shape: bf16[7,4], index: 1, kind: input, shape index: {}]
  %s2 = inlined_call_operand.vmem [shape: f32[7,1], index: 2, kind: input, shape index: {}]
  %s3 = inlined_call_operand.vmem [shape: bf16[4,2], index: 3, kind: input, shape index: {}]
  %s4 = inlined_call_operand.vmem [shape: f32[4,1], index: 4, kind: input, shape index: {}]
  %s5 = inlined_call_operand.hbm [shape: f32[2,4,256], index: 5, kind: output, shape index: {}]
  %s6 = sld [smem:[#allocation0]]
  $region61: #{tpu_custom_call.1} parent=0
    _
  %s8 = ssub.s32 1, %s6
  %s9 = scalar_select 0, %s8, %s6
  $region1: #{tpu_custom_call.1} parent=0
    #allocation5 [shape = 'u8[8192]{0}', space=vmem, size = 0x2000, scoped, tag = 'input window, operand 0']
    #allocation6 [shape = 's32[2]{0}', space=sflag, size = 0x8, scoped, tag = 'scoped memory for tpu_custom_call.1']
    #allocation7 [shape = 's32[2]{0}', space=sflag, size = 0x8, scoped, tag = 'scoped memory for tpu_custom_call.1']
    #allocation8 [shape = 'u8[4096]{0}', space=vmem, size = 0x1000, scoped, tag = 'output window, operand 0']
    %10 = vsyncpa [#allocation6], 0
    %s11 = scalar_lea.sflag [#allocation6], 1
    %12 = vsyncpa %s11, 0
    %13 = vsyncpa [#allocation7], 0
    %s14 = scalar_lea.sflag [#allocation7], 1
    %15 = vsyncpa %s14, 0
    loop: start=0, step=1, limit=6
    $region2: #{tpu_custom_call.1} parent=1 // loop_pre_header
      _
    $region3: #{tpu_custom_call.1} parent=1 // loop_header
      %s17 = sphi 0, %s21
      %p18 = scmp.ge.s32.totalorder %s17, 6
      %s24 = sphi 0, %s36
      %s25 = sphi 0, %s32
      %s26 = sphi 0, %s24
      %s27 = sphi 0, %s25
      %s28 = sphi 0, %s26
      %s29 = sphi 0, %s27
      %s39 = sphi 0, %s41
      %s42 = sphi 0, %s39
      %s43 = sphi 0, %s42
      %s59 = sphi 0, %s43
      %s63 = sphi 0, %s63
      %s65 = sphi 0, %s63
      %s66 = sphi 0, %s65
      %s80 = sphi 0, %s66
      %s84 = sphi 0, %s84
      %s86 = sphi 0, %s84
      %s87 = sphi 0, %s86
      %s101 = sphi 0, %s87
      %s105 = sphi 0, %s105
      %s107 = sphi 0, %s105
      %s108 = sphi 0, %s107
      %s122 = sphi 0, %s108
      %s126 = sphi 0, %s126
      %s128 = sphi 0, %s126
      %s129 = sphi 0, %s128
      %s143 = sphi 0, %s129
      %s151 = sphi 0, %s153
      %s154 = sphi 0, %s151
      %s155 = sphi 0, %s154
      %s171 = sphi 0, %s155
    $region4: #{tpu_custom_call.1} parent=1 // loop_header_branch
      %20 = sbr.rel (%p18) target = $region8
    $region5: #{tpu_custom_call.1} parent=1 // loop_body
      %s22 = ssub.s32 %s17, 1
      %s23 = ssub.s32 %s17, 2
      %s30 = sadd.s32 1, %s25
      %p31 = scmp.ge.s32.totalorder %s30, 2
      %s32 = scalar_select %p31, 0, %s30
      %s33 = sadd.s32 1, %s24
      %s34 = scalar_select %p31, %s33, %s24
      %p35 = scmp.ge.s32.totalorder %s34, 2
      %s36 = scalar_select %p35, 0, %s34
      %s37 = ssub.s32 %s24, %s36
      %p38 = scmp.eq.s32.totalorder %s37, 0
      %s40 = sadd.s32 %s39, 1
      %s41 = scalar_select %p38, %s39, %s40
      %p44 = pneg %p38
      %p45 = scmp.eq.s32.totalorder %s17, 3
      %p46 = por %p44, %p45
      %p47 = scmp.ne.s32.totalorder %s39, %s42
      %p48 = scmp.eq.s32.totalorder %s17, 0
      %p49 = por %p47, %p48
      %p50 = scmp.ne.s32.totalorder %s39, %s42
      %p51 = scmp.eq.s32.totalorder %s22, 3
      %p52 = por %p50, %p51
      %p53 = scmp.ne.s32.totalorder %s42, %s43
      %p54 = scmp.eq.s32.totalorder %s22, 0
      %p55 = por %p53, %p54
      %p56 = scmp.ne.s32.totalorder %s42, %s43
      %p57 = scmp.eq.s32.totalorder %s23, 3
      %p58 = por %p56, %p57
      %p60 = scmp.ne.s32.totalorder %s43, %s59
      %p61 = scmp.eq.s32.totalorder %s23, 0
      %p62 = por %p60, %p61
      %s64 = sadd.s32 %s63, 1
      %p67 = scmp.eq.s32.totalorder %s17, 3
      %p68 = scmp.ne.s32.totalorder %s63, %s65
      %p69 = scmp.eq.s32.totalorder %s17, 0
      %p70 = por %p68, %p69
      %p71 = scmp.ne.s32.totalorder %s63, %s65
      %p72 = scmp.eq.s32.totalorder %s22, 3
      %p73 = por %p71, %p72
      %p74 = scmp.ne.s32.totalorder %s65, %s66
      %p75 = scmp.eq.s32.totalorder %s22, 0
      %p76 = por %p74, %p75
      %p77 = scmp.ne.s32.totalorder %s65, %s66
      %p78 = scmp.eq.s32.totalorder %s23, 3
      %p79 = por %p77, %p78
      %p81 = scmp.ne.s32.totalorder %s66, %s80
      %p82 = scmp.eq.s32.totalorder %s23, 0
      %p83 = por %p81, %p82
      %s85 = sadd.s32 %s84, 1
      %p88 = scmp.eq.s32.totalorder %s17, 3
      %p89 = scmp.ne.s32.totalorder %s84, %s86
      %p90 = scmp.eq.s32.totalorder %s17, 0
      %p91 = por %p89, %p90
      %p92 = scmp.ne.s32.totalorder %s84, %s86
      %p93 = scmp.eq.s32.totalorder %s22, 3
      %p94 = por %p92, %p93
      %p95 = scmp.ne.s32.totalorder %s86, %s87
      %p96 = scmp.eq.s32.totalorder %s22, 0
      %p97 = por %p95, %p96
      %p98 = scmp.ne.s32.totalorder %s86, %s87
      %p99 = scmp.eq.s32.totalorder %s23, 3
      %p100 = por %p98, %p99
      %p102 = scmp.ne.s32.totalorder %s87, %s101
      %p103 = scmp.eq.s32.totalorder %s23, 0
      %p104 = por %p102, %p103
      %s106 = sadd.s32 %s105, 1
      %p109 = scmp.eq.s32.totalorder %s17, 3
      %p110 = scmp.ne.s32.totalorder %s105, %s107
      %p111 = scmp.eq.s32.totalorder %s17, 0
      %p112 = por %p110, %p111
      %p113 = scmp.ne.s32.totalorder %s105, %s107
      %p114 = scmp.eq.s32.totalorder %s22, 3
      %p115 = por %p113, %p114
      %p116 = scmp.ne.s32.totalorder %s107, %s108
      %p117 = scmp.eq.s32.totalorder %s22, 0
      %p118 = por %p116, %p117
      %p119 = scmp.ne.s32.totalorder %s107, %s108
      %p120 = scmp.eq.s32.totalorder %s23, 3
      %p121 = por %p119, %p120
      %p123 = scmp.ne.s32.totalorder %s108, %s122
      %p124 = scmp.eq.s32.totalorder %s23, 0
      %p125 = por %p123, %p124
      %s127 = sadd.s32 %s126, 1
      %p130 = scmp.eq.s32.totalorder %s17, 3
      %p131 = scmp.ne.s32.totalorder %s126, %s128
      %p132 = scmp.eq.s32.totalorder %s17, 0
      %p133 = por %p131, %p132
      %p134 = scmp.ne.s32.totalorder %s126, %s128
      %p135 = scmp.eq.s32.totalorder %s22, 3
      %p136 = por %p134, %p135
      %p137 = scmp.ne.s32.totalorder %s128, %s129
      %p138 = scmp.eq.s32.totalorder %s22, 0
      %p139 = por %p137, %p138
      %p140 = scmp.ne.s32.totalorder %s128, %s129
      %p141 = scmp.eq.s32.totalorder %s23, 3
      %p142 = por %p140, %p141
      %p144 = scmp.ne.s32.totalorder %s129, %s143
      %p145 = scmp.eq.s32.totalorder %s23, 0
      %p146 = por %p144, %p145
      %s147 = ssub.s32 %s24, %s36
      %s148 = ssub.s32 %s25, %s32
      %s149 = sor.u32 %s147, %s148
      %p150 = scmp.eq.s32.totalorder %s149, 0
      %s152 = sadd.s32 %s151, 1
      %s153 = scalar_select %p150, %s151, %s152
      %p156 = pneg %p150
      %p157 = scmp.eq.s32.totalorder %s17, 3
      %p158 = por %p156, %p157
      %p159 = scmp.ne.s32.totalorder %s151, %s154
      %p160 = scmp.eq.s32.totalorder %s17, 0
      %p161 = por %p159, %p160
      %p162 = scmp.ne.s32.totalorder %s151, %s154
      %p163 = scmp.eq.s32.totalorder %s22, 3
      %p164 = por %p162, %p163
      %p165 = scmp.ne.s32.totalorder %s154, %s155
      %p166 = scmp.eq.s32.totalorder %s22, 0
      %p167 = por %p165, %p166
      %p168 = scmp.ne.s32.totalorder %s154, %s155
      %p169 = scmp.eq.s32.totalorder %s23, 3
      %p170 = por %p168, %p169
      %p172 = scmp.ne.s32.totalorder %s155, %s171
      %p173 = scmp.eq.s32.totalorder %s23, 0
      %p174 = por %p172, %p173
      %p175 = scmp.le.s32.totalorder 1, %s17
      %p176 = scmp.lt.s32.totalorder %s17, 5
      %p177 = pnand %p175, %p176
      %p178 = pneg %p177
      // Predicated region
      $region9: #{tpu_custom_call.1} parent=5 // pred_check
        _
      $region10: #{tpu_custom_call.1} parent=5 // pred_check_branch
        %180 = sbr.rel (%p177) target = $region12
      $region11: #{tpu_custom_call.1} parent=5 // pred_region
        %s181 = ssub.s32 %s17, 1
        // Predicated region
        $region13: #{tpu_custom_call.1} parent=11 // pred_check
          %p182 = pneg %p76
        $region14: #{tpu_custom_call.1} parent=11 // pred_check_branch
          %184 = sbr.rel (%p182) target = $region16
        $region15: #{tpu_custom_call.1} parent=11 // pred_region
          _
        $region16: #{tpu_custom_call.1} parent=11 // pred_fallthru
          _
        // Predicated region
        $region17: #{tpu_custom_call.1} parent=11 // pred_check
          %p185 = pneg %p97
        $region18: #{tpu_custom_call.1} parent=11 // pred_check_branch
          %187 = sbr.rel (%p185) target = $region20
        $region19: #{tpu_custom_call.1} parent=11 // pred_region
          _
        $region20: #{tpu_custom_call.1} parent=11 // pred_fallthru
          _
        // Predicated region
        $region21: #{tpu_custom_call.1} parent=11 // pred_check
          %p188 = pneg %p118
        $region22: #{tpu_custom_call.1} parent=11 // pred_check_branch
          %190 = sbr.rel (%p188) target = $region24
        $region23: #{tpu_custom_call.1} parent=11 // pred_region
          _
        $region24: #{tpu_custom_call.1} parent=11 // pred_fallthru
          _
        // Predicated region
        $region25: #{tpu_custom_call.1} parent=11 // pred_check
          %p191 = pneg %p139
        $region26: #{tpu_custom_call.1} parent=11 // pred_check_branch
          %193 = sbr.rel (%p191) target = $region28
        $region27: #{tpu_custom_call.1} parent=11 // pred_region
          _
        $region28: #{tpu_custom_call.1} parent=11 // pred_fallthru
          _
      $region12: #{tpu_custom_call.1} parent=5 // pred_fallthru
        _
      %p194 = scmp.lt.s32.totalorder %s17, 4
      // Predicated region
      $region29: #{tpu_custom_call.1} parent=5 // pred_check
        %p195 = pneg %p194
      $region30: #{tpu_custom_call.1} parent=5 // pred_check_branch
        %197 = sbr.rel (%p195) target = $region32
      $region31: #{tpu_custom_call.1} parent=5 // pred_region
        // Predicated region
        $region33: #{tpu_custom_call.1} parent=31 // pred_check
          %p198 = pneg %p49
        $region34: #{tpu_custom_call.1} parent=31 // pred_check_branch
          %200 = sbr.rel (%p198) target = $region36
        $region35: #{tpu_custom_call.1} parent=31 // pred_region
          %s201 = sand.u32 %s39, 1
          %s202 = scalar_lea.sflag [#allocation6], %s201
          %s203 = sand.u32 %s39, 1
          %s204 = smul.addr %s203, 8
          %s205 = scalar_lea.vmem [#allocation5], %s204
          %207 = vsyncadd %s202, 0
          %s208 = smul.addr %s24, 2
          %s209 = smul.addr %s208, 4
          %s210 = scalar_lea.hbm %s0, %s209
          %s212 = sshll.u32 %s210, 4
          %s213 = int_to_ptr.hbm [resolvable:$true] %s212
          %s214 = sshll.u32 %s205, 4
          %s215 = int_to_ptr.vmem [resolvable:$true] %s214
          %217 = dma.hbm_to_vmem [thread:$0]  %s213, 128, %s215, %s202
        $region36: #{tpu_custom_call.1} parent=31 // pred_fallthru
          _
      $region32: #{tpu_custom_call.1} parent=5 // pred_fallthru
        _
      %p218 = scmp.le.s32.totalorder 1, %s17
      %p219 = scmp.lt.s32.totalorder %s17, 5
      %p220 = pnand %p218, %p219
      %p221 = pneg %p220
      // Predicated region
      $region37: #{tpu_custom_call.1} parent=5 // pred_check
        _
      $region38: #{tpu_custom_call.1} parent=5 // pred_check_branch
        %223 = sbr.rel (%p220) target = $region40
      $region39: #{tpu_custom_call.1} parent=5 // pred_region
        %s224 = ssub.s32 %s17, 1
        %s225 = sand.u32 %s42, 1
        %s226 = scalar_lea.sflag [#allocation6], %s225
        %s227 = sand.u32 %s42, 1
        %s228 = smul.addr %s227, 8
        %s229 = scalar_lea.vmem [#allocation5], %s228
        // Predicated region
        $region41: #{tpu_custom_call.1} parent=39 // pred_check
          %p230 = pneg %p55
        $region42: #{tpu_custom_call.1} parent=39 // pred_check_branch
          %232 = sbr.rel (%p230) target = $region44
        $region43: #{tpu_custom_call.1} parent=39 // pred_region
          %234 = dma.done %s226, 128
        $region44: #{tpu_custom_call.1} parent=39 // pred_fallthru
          _
        %s235 = sand.u32 %s42, 1
        %s236 = scalar_lea.sflag [#allocation6], %s235
        %s237 = sand.u32 %s42, 1
        %s238 = smul.addr %s237, 8
        %s239 = scalar_lea.vmem [#allocation5], %s238
        %p240 = pneg %p55
        %p241 = pneg %p52
        %p242 = pneg %p76
        %p243 = pneg %p73
        %p244 = pneg %p97
        %p245 = pneg %p94
        %p246 = pneg %p118
        %p247 = pneg %p115
        %p248 = pneg %p139
        %p249 = pneg %p136
        %p250 = pneg %p167
        %p251 = pneg %p164
        %s252 = sand.u32 %s154, 1
        %s253 = scalar_lea.sflag [#allocation7], %s252
        %s254 = sand.u32 %s154, 1
        %s255 = smul.addr %s254, 4
        %s256 = scalar_lea.vmem [#allocation8], %s255
        %p258 = scmp.eq.s32.totalorder %s27, 0
        // Predicated region
        $region45: #{tpu_custom_call.1} parent=39 // pred_check
          %p259 = pneg %p258
        $region46: #{tpu_custom_call.1} parent=39 // pred_check_branch
          %261 = sbr.rel (%p259) target = $region48
        $region47: #{tpu_custom_call.1} parent=39 // pred_region
          %v262 = vld [vmem:[%s229] sm:$0xff]
          %264 = vst [vmem:[#allocation1] ss:$2 sm:$0xff] %v262
          %v265 = vld.sshfl [vmem:[#allocation1] sm:$0xff pattern:$0x75316420]
          %v266 = vld.sshfl [vmem:[#allocation1 + $0x8] sm:$0xff pattern:$0x75316420]
          %v269 = vpack.c.bf16 %v265, %v265
          %v270 = vpack.c.bf16 %v266, %v266
          %v271 = vld [vmem:[%s1] sm:$0xf]
          %v272 = vld [vmem:[%s2] sm:$0x7f]
          %274 = vset.pattern.permute.xlu0 0
          %275 = vperm.xlu0 %274, %v272
          %v276 = vpop.permute.xlu0 %275
          %vm278 = vcmask 31744
          %v280 = vsel %vm278, %v271, 0
          %vm282 = vcmask 1041408
          %v284 = vsel %vm282, %v269, 0
          %v287 = vsel %vm282, %v270, 0
          %289 = vmatpush.bf16.msra.mxu0 0
          %290 = vmatpush.bf16.msra.mxu0 0
          %291 = vmatpush.bf16.msra.mxu0 0
          %292 = vmatpush.bf16.msra.mxu0 0
          %293 = vmatpush.bf16.msra.mxu0 0
          %294 = vmatpush.bf16.msra.mxu0 0
          %295 = vmatpush.bf16.msra.mxu0 0
          %296 = vmatpush.bf16.msra.mxu0 %v284
          %297 = vmatmul.bf16.gmra.mxu0 %v280
          %v298 = vpop.f32.mrf.mxu0
          %v299 = vadd.f32 %v276, %v298
          %v300 = vpop.f32.mrf.mxu0
          %301 = vdwg.mxu0
          %302 = vmatpush.bf16.msra.mxu0 0
          %303 = vmatpush.bf16.msra.mxu0 0
          %304 = vmatpush.bf16.msra.mxu0 0
          %305 = vmatpush.bf16.msra.mxu0 0
          %306 = vmatpush.bf16.msra.mxu0 0
          %307 = vmatpush.bf16.msra.mxu0 0
          %308 = vmatpush.bf16.msra.mxu0 0
          %309 = vmatpush.bf16.msra.mxu0 %v287
          %310 = vmatmul.bf16.gmra.mxu0 %v280
          %v311 = vpop.f32.mrf.mxu0
          %v312 = vadd.f32 %v276, %v311
          %v313 = vpop.f32.mrf.mxu0
          %314 = vdwg.mxu0
          %315 = vxpose.xlu0.b32.start [1/16] %v299, 128
          %316 = vxpose.xlu0.b32.cont [2/16] 0.0, 128
          %317 = vxpose.xlu0.b32.cont [3/16] 0.0, 128
          %318 = vxpose.xlu0.b32.cont [4/16] 0.0, 128
          %319 = vxpose.xlu0.b32.cont [5/16] 0.0, 128
          %320 = vxpose.xlu0.b32.cont [6/16] 0.0, 128
          %321 = vxpose.xlu0.b32.cont [7/16] 0.0, 128
          %322 = vxpose.xlu0.b32.cont [8/16] 0.0, 128
          %323 = vxpose.xlu0.b32.cont [9/16] 0.0, 128
          %324 = vxpose.xlu0.b32.cont [10/16] 0.0, 128
          %325 = vxpose.xlu0.b32.cont [11/16] 0.0, 128
          %326 = vxpose.xlu0.b32.cont [12/16] 0.0, 128
          %327 = vxpose.xlu0.b32.cont [13/16] 0.0, 128
          %328 = vxpose.xlu0.b32.cont [14/16] 0.0, 128
          %329 = vxpose.xlu0.b32.cont [15/16] 0.0, 128
          %330 = vxpose.xlu0.b32.end [16/16] 0.0, 128
          %v331 = vpop.trf.xlu0
          %v332 = vpop.trf.xlu0
          %v333 = vpop.trf.xlu0
          %v334 = vpop.trf.xlu0
          %v335 = vpop.trf.xlu0
          %v336 = vpop.trf.xlu0
          %v337 = vpop.trf.xlu0
          %v338 = vpop.trf.xlu0
          %v339 = vpop.trf.xlu0
          %v340 = vpop.trf.xlu0
          %v341 = vpop.trf.xlu0
          %v342 = vpop.trf.xlu0
          %v343 = vpop.trf.xlu0
          %v344 = vpop.trf.xlu0
          %v345 = vpop.trf.xlu0
          %v346 = vpop.trf.xlu0
          %347 = vxpose.xlu0.b32.start [1/16] %v312, 128
          %348 = vxpose.xlu0.b32.cont [2/16] 0.0, 128
          %349 = vxpose.xlu0.b32.cont [3/16] 0.0, 128
          %350 = vxpose.xlu0.b32.cont [4/16] 0.0, 128
          %351 = vxpose.xlu0.b32.cont [5/16] 0.0, 128
          %352 = vxpose.xlu0.b32.cont [6/16] 0.0, 128
          %353 = vxpose.xlu0.b32.cont [7/16] 0.0, 128
          %354 = vxpose.xlu0.b32.cont [8/16] 0.0, 128
          %355 = vxpose.xlu0.b32.cont [9/16] 0.0, 128
          %356 = vxpose.xlu0.b32.cont [10/16] 0.0, 128
          %357 = vxpose.xlu0.b32.cont [11/16] 0.0, 128
          %358 = vxpose.xlu0.b32.cont [12/16] 0.0, 128
          %359 = vxpose.xlu0.b32.cont [13/16] 0.0, 128
          %360 = vxpose.xlu0.b32.cont [14/16] 0.0, 128
          %361 = vxpose.xlu0.b32.cont [15/16] 0.0, 128
          %362 = vxpose.xlu0.b32.end [16/16] 0.0, 128
          %v363 = vpop.trf.xlu0
          %v364 = vpop.trf.xlu0
          %v365 = vpop.trf.xlu0
          %v366 = vpop.trf.xlu0
          %v367 = vpop.trf.xlu0
          %v368 = vpop.trf.xlu0
          %v369 = vpop.trf.xlu0
          %v370 = vpop.trf.xlu0
          %v371 = vpop.trf.xlu0
          %v372 = vpop.trf.xlu0
          %v373 = vpop.trf.xlu0
          %v374 = vpop.trf.xlu0
          %v375 = vpop.trf.xlu0
          %v376 = vpop.trf.xlu0
          %v377 = vpop.trf.xlu0
          %v378 = vpop.trf.xlu0
          %v379 = vpack.c.bf16 %v331, %v331
          %v380 = vpack.c.bf16 %v332, %v332
          %v381 = vpack.c.bf16 %v333, %v333
          %v382 = vpack.c.bf16 %v334, %v334
          %v383 = vpack.c.bf16 %v335, %v335
          %v384 = vpack.c.bf16 %v336, %v336
          %v385 = vpack.c.bf16 %v337, %v337
          %v386 = vpack.c.bf16 %v338, %v338
          %v387 = vpack.c.bf16 %v339, %v339
          %v388 = vpack.c.bf16 %v340, %v340
          %v389 = vpack.c.bf16 %v341, %v341
          %v390 = vpack.c.bf16 %v342, %v342
          %v391 = vpack.c.bf16 %v343, %v343
          %v392 = vpack.c.bf16 %v344, %v344
          %v393 = vpack.c.bf16 %v345, %v345
          %v394 = vpack.c.bf16 %v346, %v346
          %v395 = vpack.c.bf16 %v363, %v363
          %v396 = vpack.c.bf16 %v364, %v364
          %v397 = vpack.c.bf16 %v365, %v365
          %v398 = vpack.c.bf16 %v366, %v366
          %v399 = vpack.c.bf16 %v367, %v367
          %v400 = vpack.c.bf16 %v368, %v368
          %v401 = vpack.c.bf16 %v369, %v369
          %v402 = vpack.c.bf16 %v370, %v370
          %v403 = vpack.c.bf16 %v371, %v371
          %v404 = vpack.c.bf16 %v372, %v372
          %v405 = vpack.c.bf16 %v373, %v373
          %v406 = vpack.c.bf16 %v374, %v374
          %v407 = vpack.c.bf16 %v375, %v375
          %v408 = vpack.c.bf16 %v376, %v376
          %v409 = vpack.c.bf16 %v377, %v377
          %v410 = vpack.c.bf16 %v378, %v378
          %vm411 = vcmask 11264
          %412 = vst.msk [vmem:[#allocation2] sm:$0xf] %vm411, %v379
          %413 = vst.msk [vmem:[#allocation2 + $0x4] sm:$0xf] %vm411, %v380
          %414 = vst.msk [vmem:[#allocation2 + $0x8] sm:$0xf] %vm411, %v381
          %415 = vst.msk [vmem:[#allocation2 + $0xc] sm:$0xf] %vm411, %v382
          %416 = vst.msk [vmem:[#allocation2 + $0x10] sm:$0xf] %vm411, %v383
          %417 = vst.msk [vmem:[#allocation2 + $0x14] sm:$0xf] %vm411, %v384
          %418 = vst.msk [vmem:[#allocation2 + $0x18] sm:$0xf] %vm411, %v385
          %419 = vst.msk [vmem:[#allocation2 + $0x1c] sm:$0xf] %vm411, %v386
          %420 = vst.msk [vmem:[#allocation2 + $0x20] sm:$0xf] %vm411, %v387
          %421 = vst.msk [vmem:[#allocation2 + $0x24] sm:$0xf] %vm411, %v388
          %422 = vst.msk [vmem:[#allocation2 + $0x28] sm:$0xf] %vm411, %v389
          %423 = vst.msk [vmem:[#allocation2 + $0x2c] sm:$0xf] %vm411, %v390
          %424 = vst.msk [vmem:[#allocation2 + $0x30] sm:$0xf] %vm411, %v391
          %425 = vst.msk [vmem:[#allocation2 + $0x34] sm:$0xf] %vm411, %v392
          %426 = vst.msk [vmem:[#allocation2 + $0x38] sm:$0xf] %vm411, %v393
          %427 = vst.msk [vmem:[#allocation2 + $0x3c] sm:$0xf] %vm411, %v394
          %428 = vst.msk [vmem:[#allocation2 + $0x40] sm:$0xf] %vm411, %v395
          %429 = vst.msk [vmem:[#allocation2 + $0x44] sm:$0xf] %vm411, %v396
          %430 = vst.msk [vmem:[#allocation2 + $0x48] sm:$0xf] %vm411, %v397
          %431 = vst.msk [vmem:[#allocation2 + $0x4c] sm:$0xf] %vm411, %v398
          %432 = vst.msk [vmem:[#allocation2 + $0x50] sm:$0xf] %vm411, %v399
          %433 = vst.msk [vmem:[#allocation2 + $0x54] sm:$0xf] %vm411, %v400
          %434 = vst.msk [vmem:[#allocation2 + $0x58] sm:$0xf] %vm411, %v401
          %435 = vst.msk [vmem:[#allocation2 + $0x5c] sm:$0xf] %vm411, %v402
          %436 = vst.msk [vmem:[#allocation2 + $0x60] sm:$0xf] %vm411, %v403
          %437 = vst.msk [vmem:[#allocation2 + $0x64] sm:$0xf] %vm411, %v404
          %438 = vst.msk [vmem:[#allocation2 + $0x68] sm:$0xf] %vm411, %v405
          %439 = vst.msk [vmem:[#allocation2 + $0x6c] sm:$0xf] %vm411, %v406
          %440 = vst.msk [vmem:[#allocation2 + $0x70] sm:$0xf] %vm411, %v407
          %441 = vst.msk [vmem:[#allocation2 + $0x74] sm:$0xf] %vm411, %v408
          %442 = vst.msk [vmem:[#allocation2 + $0x78] sm:$0xf] %vm411, %v409
          %443 = vst.msk [vmem:[#allocation2 + $0x7c] sm:$0xf] %vm411, %v410
          %v444 = vpack.c.bf16 %v312, %v299
          %446 = vst [vmem:[#allocation1] sm:$0xff] %v444
          %s447 = scalar_lea.vmem [#allocation1], 1
          %v448 = vld [vmem:[%s447] ss:$4 sm:$0xff]
          %450 = vst [vmem:[#allocation3] sm:$0x3] %v448
          %451 = vst.sshfl [vmem:[#allocation1] sm:$0xff pattern:$0x75643120] %v444
          %s452 = scalar_lea.vmem [#allocation1], 1
          %v453 = vld [vmem:[%s452] ss:$2 sm:$0xff]
          %vm455 = vcmask 1041408
          %vm456 = vsmask.f32 1280
          %vm457 = vmand %vm455, %vm456
          %vm458 = vcmask 1043458
          %vm459 = vsmask.f32 3328
          %vm460 = vmand %vm458, %vm459
          %vm461 = vmor %vm460, %vm457
          %v462 = vld [vmem:[#allocation4] sm:$0xf]
          %v463 = vsel %vm461, %v453, %v462
          %464 = vst [vmem:[#allocation4] sm:$0xf] %v463
        $region48: #{tpu_custom_call.1} parent=39 // pred_fallthru
          _
        %s465 = smul.u32 %s27, 128
        %s466 = sshra.s32 %s465, 3
        %s467 = sand.u32 %s465, 7
        %s468 = smul.addr %s466, 4
        %s469 = scalar_lea.vmem [#allocation2], %s468
        %v470 = vld [vmem:[%s469] sm:$0xf]
        %v471 = vld [vmem:[%s469 + $0x4] sm:$0xf]
        %v472 = vld [vmem:[%s469 + $0x8] sm:$0xf]
        %v473 = vld [vmem:[%s469 + $0xc] sm:$0xf]
        %v474 = vld [vmem:[%s469 + $0x10] sm:$0xf]
        %v475 = vld [vmem:[%s469 + $0x14] sm:$0xf]
        %v476 = vld [vmem:[%s469 + $0x18] sm:$0xf]
        %v477 = vld [vmem:[%s469 + $0x1c] sm:$0xf]
        %v478 = vld [vmem:[%s469 + $0x20] sm:$0xf]
        %v479 = vld [vmem:[%s469 + $0x24] sm:$0xf]
        %v480 = vld [vmem:[%s469 + $0x28] sm:$0xf]
        %v481 = vld [vmem:[%s469 + $0x2c] sm:$0xf]
        %v482 = vld [vmem:[%s469 + $0x30] sm:$0xf]
        %v483 = vld [vmem:[%s469 + $0x34] sm:$0xf]
        %v484 = vld [vmem:[%s469 + $0x38] sm:$0xf]
        %v485 = vld [vmem:[%s469 + $0x3c] sm:$0xf]
        %v486 = vld [vmem:[#allocation3] sm:$0x3]
        %v503 = vunpack.c.l.b16 %v470
        %v504 = vunpack.c.l.b16 %v471
        %v505 = vunpack.c.l.b16 %v472
        %v506 = vunpack.c.l.b16 %v473
        %v507 = vunpack.c.l.b16 %v474
        %v508 = vunpack.c.l.b16 %v475
        %v509 = vunpack.c.l.b16 %v476
        %v510 = vunpack.c.l.b16 %v477
        %v511 = vunpack.c.l.b16 %v478
        %v512 = vunpack.c.l.b16 %v479
        %v513 = vunpack.c.l.b16 %v480
        %v514 = vunpack.c.l.b16 %v481
        %v515 = vunpack.c.l.b16 %v482
        %v516 = vunpack.c.l.b16 %v483
        %v517 = vunpack.c.l.b16 %v484
        %v518 = vunpack.c.l.b16 %v485
        %v519 = vpack.c.b16 %v504, %v503
        %v520 = vpack.c.b16 %v506, %v505
        %v521 = vpack.c.b16 %v508, %v507
        %v522 = vpack.c.b16 %v510, %v509
        %v523 = vpack.c.b16 %v512, %v511
        %v524 = vpack.c.b16 %v514, %v513
        %v525 = vpack.c.b16 %v516, %v515
        %v526 = vpack.c.b16 %v518, %v517
        %528 = vst [vmem:[#allocation1] ss:$9 sm:$0xff] %v486
        %v529 = vld [vmem:[#allocation1] sm:$0xff]
        %v530 = vld [vmem:[#allocation1 + $0x9] sm:$0xff]
        %vm531 = vcmask 15360
        %v533 = vsel %vm531, %v519, 0
        %v536 = vsel %vm531, %v520, 0
        %v539 = vsel %vm531, %v521, 0
        %v542 = vsel %vm531, %v522, 0
        %v545 = vsel %vm531, %v523, 0
        %v548 = vsel %vm531, %v524, 0
        %v551 = vsel %vm531, %v525, 0
        %v554 = vsel %vm531, %v526, 0
        %vm556 = vcmask 1040384
        %v557 = vsel %vm556, %v529, 0
        %v559 = vsel %vm556, %v530, 0
        %561 = vmatpush.bf16.msra.mxu0 0
        %562 = vmatpush.bf16.msra.mxu0 0
        %563 = vmatpush.bf16.msra.mxu0 0
        %564 = vmatpush.bf16.msra.mxu0 0
        %565 = vmatpush.bf16.msra.mxu0 0
        %566 = vmatpush.bf16.msra.mxu0 0
        %567 = vmatpush.bf16.msra.mxu0 0
        %568 = vmatpush.bf16.msra.mxu0 %v557
        %569 = vmatmul.bf16.gmra.mxu0 %v533
        %v570 = vpop.f32.mrf.mxu0
        %v571 = vadd.f32 0.0, %v570
        %v572 = vpop.f32.mrf.mxu0
        %v573 = vadd.f32 0.0, %v572
        %574 = vmatmul.bf16.gmra.mxu0 %v536
        %v575 = vpop.f32.mrf.mxu0
        %v576 = vadd.f32 0.0, %v575
        %v577 = vpop.f32.mrf.mxu0
        %v578 = vadd.f32 0.0, %v577
        %579 = vmatmul.bf16.gmra.mxu0 %v539
        %v580 = vpop.f32.mrf.mxu0
        %v581 = vadd.f32 0.0, %v580
        %v582 = vpop.f32.mrf.mxu0
        %v583 = vadd.f32 0.0, %v582
        %584 = vmatmul.bf16.gmra.mxu0 %v542
        %v585 = vpop.f32.mrf.mxu0
        %v586 = vadd.f32 0.0, %v585
        %v587 = vpop.f32.mrf.mxu0
        %v588 = vadd.f32 0.0, %v587
        %589 = vmatmul.bf16.gmra.mxu0 %v545
        %v590 = vpop.f32.mrf.mxu0
        %v591 = vadd.f32 0.0, %v590
        %v592 = vpop.f32.mrf.mxu0
        %v593 = vadd.f32 0.0, %v592
        %594 = vmatmul.bf16.gmra.mxu0 %v548
        %v595 = vpop.f32.mrf.mxu0
        %v596 = vadd.f32 0.0, %v595
        %v597 = vpop.f32.mrf.mxu0
        %v598 = vadd.f32 0.0, %v597
        %599 = vmatmul.bf16.gmra.mxu0 %v551
        %v600 = vpop.f32.mrf.mxu0
        %v601 = vadd.f32 0.0, %v600
        %v602 = vpop.f32.mrf.mxu0
        %v603 = vadd.f32 0.0, %v602
        %604 = vmatmul.bf16.gmra.mxu0 %v554
        %v605 = vpop.f32.mrf.mxu0
        %v606 = vadd.f32 0.0, %v605
        %v607 = vpop.f32.mrf.mxu0
        %v608 = vadd.f32 0.0, %v607
        %609 = vdwg.mxu0
        %610 = vmatpush.bf16.msra.mxu0 0
        %611 = vmatpush.bf16.msra.mxu0 0
        %612 = vmatpush.bf16.msra.mxu0 0
        %613 = vmatpush.bf16.msra.mxu0 0
        %614 = vmatpush.bf16.msra.mxu0 0
        %615 = vmatpush.bf16.msra.mxu0 0
        %616 = vmatpush.bf16.msra.mxu0 0
        %617 = vmatpush.bf16.msra.mxu0 %v559
        %618 = vmatmul.bf16.gmra.mxu0 %v533
        %v619 = vpop.f32.mrf.mxu0
        %v620 = vadd.f32 0.0, %v619
        %v621 = vpop.f32.mrf.mxu0
        %v622 = vadd.f32 0.0, %v621
        %623 = vmatmul.bf16.gmra.mxu0 %v536
        %v624 = vpop.f32.mrf.mxu0
        %v625 = vadd.f32 0.0, %v624
        %v626 = vpop.f32.mrf.mxu0
        %v627 = vadd.f32 0.0, %v626
        %628 = vmatmul.bf16.gmra.mxu0 %v539
        %v629 = vpop.f32.mrf.mxu0
        %v630 = vadd.f32 0.0, %v629
        %v631 = vpop.f32.mrf.mxu0
        %v632 = vadd.f32 0.0, %v631
        %633 = vmatmul.bf16.gmra.mxu0 %v542
        %v634 = vpop.f32.mrf.mxu0
        %v635 = vadd.f32 0.0, %v634
        %v636 = vpop.f32.mrf.mxu0
        %v637 = vadd.f32 0.0, %v636
        %638 = vmatmul.bf16.gmra.mxu0 %v545
        %v639 = vpop.f32.mrf.mxu0
        %v640 = vadd.f32 0.0, %v639
        %v641 = vpop.f32.mrf.mxu0
        %v642 = vadd.f32 0.0, %v641
        %643 = vmatmul.bf16.gmra.mxu0 %v548
        %v644 = vpop.f32.mrf.mxu0
        %v645 = vadd.f32 0.0, %v644
        %v646 = vpop.f32.mrf.mxu0
        %v647 = vadd.f32 0.0, %v646
        %648 = vmatmul.bf16.gmra.mxu0 %v551
        %v649 = vpop.f32.mrf.mxu0
        %v650 = vadd.f32 0.0, %v649
        %v651 = vpop.f32.mrf.mxu0
        %v652 = vadd.f32 0.0, %v651
        %653 = vmatmul.bf16.gmra.mxu0 %v554
        %v654 = vpop.f32.mrf.mxu0
        %v655 = vadd.f32 0.0, %v654
        %v656 = vpop.f32.mrf.mxu0
        %v657 = vadd.f32 0.0, %v656
        %658 = vdwg.mxu0
        %v659 = vmax.f32 %v571, %v620
        %660 = vmax.xlane.f32.xlu0 %v659
        %v661 = vpop.xlane.xlu0 %660
        %v662 = vmax.f32 %v573, %v622
        %663 = vmax.xlane.f32.xlu0 %v662
        %v664 = vpop.xlane.xlu0 %663
        %v665 = vmax.f32 %v576, %v625
        %666 = vmax.xlane.f32.xlu0 %v665
        %v667 = vpop.xlane.xlu0 %666
        %v668 = vmax.f32 %v578, %v627
        %669 = vmax.xlane.f32.xlu0 %v668
        %v670 = vpop.xlane.xlu0 %669
        %v671 = vmax.f32 %v581, %v630
        %672 = vmax.xlane.f32.xlu0 %v671
        %v673 = vpop.xlane.xlu0 %672
        %v674 = vmax.f32 %v583, %v632
        %675 = vmax.xlane.f32.xlu0 %v674
        %v676 = vpop.xlane.xlu0 %675
        %v677 = vmax.f32 %v586, %v635
        %678 = vmax.xlane.f32.xlu0 %v677
        %v679 = vpop.xlane.xlu0 %678
        %v680 = vmax.f32 %v588, %v637
        %681 = vmax.xlane.f32.xlu0 %v680
        %v682 = vpop.xlane.xlu0 %681
        %v683 = vmax.f32 %v591, %v640
        %684 = vmax.xlane.f32.xlu0 %v683
        %v685 = vpop.xlane.xlu0 %684
        %v686 = vmax.f32 %v593, %v642
        %687 = vmax.xlane.f32.xlu0 %v686
        %v688 = vpop.xlane.xlu0 %687
        %v689 = vmax.f32 %v596, %v645
        %690 = vmax.xlane.f32.xlu0 %v689
        %v691 = vpop.xlane.xlu0 %690
        %v692 = vmax.f32 %v598, %v647
        %693 = vmax.xlane.f32.xlu0 %v692
        %v694 = vpop.xlane.xlu0 %693
        %v695 = vmax.f32 %v601, %v650
        %696 = vmax.xlane.f32.xlu0 %v695
        %v697 = vpop.xlane.xlu0 %696
        %v698 = vmax.f32 %v603, %v652
        %699 = vmax.xlane.f32.xlu0 %v698
        %v700 = vpop.xlane.xlu0 %699
        %v701 = vmax.f32 %v606, %v655
        %702 = vmax.xlane.f32.xlu0 %v701
        %v703 = vpop.xlane.xlu0 %702
        %v704 = vmax.f32 %v608, %v657
        %705 = vmax.xlane.f32.xlu0 %v704
        %v706 = vpop.xlane.xlu0 %705
        %v707 = vsub.f32 %v571, %v661
        %v708 = vsub.f32 %v620, %v661
        %v709 = vsub.f32 %v573, %v664
        %v710 = vsub.f32 %v622, %v664
        %v711 = vsub.f32 %v576, %v667
        %v712 = vsub.f32 %v625, %v667
        %v713 = vsub.f32 %v578, %v670
        %v714 = vsub.f32 %v627, %v670
        %v715 = vsub.f32 %v581, %v673
        %v716 = vsub.f32 %v630, %v673
        %v717 = vsub.f32 %v583, %v676
        %v718 = vsub.f32 %v632, %v676
        %v719 = vsub.f32 %v586, %v679
        %v720 = vsub.f32 %v635, %v679
        %v721 = vsub.f32 %v588, %v682
        %v722 = vsub.f32 %v637, %v682
        %v723 = vsub.f32 %v591, %v685
        %v724 = vsub.f32 %v640, %v685
        %v725 = vsub.f32 %v593, %v688
        %v726 = vsub.f32 %v642, %v688
        %v727 = vsub.f32 %v596, %v691
        %v728 = vsub.f32 %v645, %v691
        %v729 = vsub.f32 %v598, %v694
        %v730 = vsub.f32 %v647, %v694
        %v731 = vsub.f32 %v601, %v697
        %v732 = vsub.f32 %v650, %v697
        %v733 = vsub.f32 %v603, %v700
        %v734 = vsub.f32 %v652, %v700
        %v735 = vsub.f32 %v606, %v703
        %v736 = vsub.f32 %v655, %v703
        %v737 = vsub.f32 %v608, %v706
        %v738 = vsub.f32 %v657, %v706
        %v739 = vmul.f32 %v707, 1.442695
        %v740 = vpow.pop %v739
        %v741 = vmul.f32 %v708, 1.442695
        %v742 = vpow.pop %v741
        %v743 = vmul.f32 %v709, 1.442695
        %v744 = vpow.pop %v743
        %v745 = vmul.f32 %v710, 1.442695
        %v746 = vpow.pop %v745
        %v747 = vmul.f32 %v711, 1.442695
        %v748 = vpow.pop %v747
        %v749 = vmul.f32 %v712, 1.442695
        %v750 = vpow.pop %v749
        %v751 = vmul.f32 %v713, 1.442695
        %v752 = vpow.pop %v751
        %v753 = vmul.f32 %v714, 1.442695
        %v754 = vpow.pop %v753
        %v755 = vmul.f32 %v715, 1.442695
        %v756 = vpow.pop %v755
        %v757 = vmul.f32 %v716, 1.442695
        %v758 = vpow.pop %v757
        %v759 = vmul.f32 %v717, 1.442695
        %v760 = vpow.pop %v759
        %v761 = vmul.f32 %v718, 1.442695
        %v762 = vpow.pop %v761
        %v763 = vmul.f32 %v719, 1.442695
        %v764 = vpow.pop %v763
        %v765 = vmul.f32 %v720, 1.442695
        %v766 = vpow.pop %v765
        %v767 = vmul.f32 %v721, 1.442695
        %v768 = vpow.pop %v767
        %v769 = vmul.f32 %v722, 1.442695
        %v770 = vpow.pop %v769
        %v771 = vmul.f32 %v723, 1.442695
        %v772 = vpow.pop %v771
        %v773 = vmul.f32 %v724, 1.442695
        %v774 = vpow.pop %v773
        %v775 = vmul.f32 %v725, 1.442695
        %v776 = vpow.pop %v775
        %v777 = vmul.f32 %v726, 1.442695
        %v778 = vpow.pop %v777
        %v779 = vmul.f32 %v727, 1.442695
        %v780 = vpow.pop %v779
        %v781 = vmul.f32 %v728, 1.442695
        %v782 = vpow.pop %v781
        %v783 = vmul.f32 %v729, 1.442695
        %v784 = vpow.pop %v783
        %v785 = vmul.f32 %v730, 1.442695
        %v786 = vpow.pop %v785
        %v787 = vmul.f32 %v731, 1.442695
        %v788 = vpow.pop %v787
        %v789 = vmul.f32 %v732, 1.442695
        %v790 = vpow.pop %v789
        %v791 = vmul.f32 %v733, 1.442695
        %v792 = vpow.pop %v791
        %v793 = vmul.f32 %v734, 1.442695
        %v794 = vpow.pop %v793
        %v795 = vmul.f32 %v735, 1.442695
        %v796 = vpow.pop %v795
        %v797 = vmul.f32 %v736, 1.442695
        %v798 = vpow.pop %v797
        %v799 = vmul.f32 %v737, 1.442695
        %v800 = vpow.pop %v799
        %v801 = vmul.f32 %v738, 1.442695
        %v802 = vpow.pop %v801
        %v803 = vpack.c.bf16 %v744, %v740
        %v804 = vpack.c.bf16 %v746, %v742
        %v805 = vpack.c.bf16 %v752, %v748
        %v806 = vpack.c.bf16 %v754, %v750
        %v807 = vpack.c.bf16 %v760, %v756
        %v808 = vpack.c.bf16 %v762, %v758
        %v809 = vpack.c.bf16 %v768, %v764
        %v810 = vpack.c.bf16 %v770, %v766
        %v811 = vpack.c.bf16 %v776, %v772
        %v812 = vpack.c.bf16 %v778, %v774
        %v813 = vpack.c.bf16 %v784, %v780
        %v814 = vpack.c.bf16 %v786, %v782
        %v815 = vpack.c.bf16 %v792, %v788
        %v816 = vpack.c.bf16 %v794, %v790
        %v817 = vpack.c.bf16 %v800, %v796
        %v818 = vpack.c.bf16 %v802, %v798
        %v819 = vld [vmem:[#allocation4] sm:$0xf]
        %821 = vst [vmem:[#allocation1] ss:$4 sm:$0xff] %v819
        %v822 = vld.sshfl [vmem:[#allocation1] sm:$0xff pattern:$0x73625140]
        %v823 = vld.sshfl [vmem:[#allocation1 + $0x8] sm:$0xff pattern:$0x73625140]
        %826 = vmatpush.bf16.xpose.msra.mxu0 %v817
        %827 = vmatpush.bf16.xpose.msra.mxu0 %v815
        %828 = vmatpush.bf16.xpose.msra.mxu0 %v813
        %829 = vmatpush.bf16.xpose.msra.mxu0 %v811
        %830 = vmatpush.bf16.xpose.msra.mxu0 %v809
        %831 = vmatpush.bf16.xpose.msra.mxu0 %v807
        %832 = vmatpush.bf16.xpose.msra.mxu0 %v805
        %833 = vmatpush.bf16.xpose.msra.mxu0 %v803
        %834 = vmatmul.bf16.gmra.mxu0 %v822
        %v835 = vpop.f32.mrf.mxu0
        %v836 = vadd.f32 0.0, %v835
        %v837 = vpop.f32.mrf.mxu0
        %838 = vdwg.mxu0
        %839 = vmatpush.bf16.xpose.msra.mxu0 %v818
        %840 = vmatpush.bf16.xpose.msra.mxu0 %v816
        %841 = vmatpush.bf16.xpose.msra.mxu0 %v814
        %842 = vmatpush.bf16.xpose.msra.mxu0 %v812
        %843 = vmatpush.bf16.xpose.msra.mxu0 %v810
        %844 = vmatpush.bf16.xpose.msra.mxu0 %v808
        %845 = vmatpush.bf16.xpose.msra.mxu0 %v806
        %846 = vmatpush.bf16.xpose.msra.mxu0 %v804
        %847 = vmatmul.bf16.gmra.mxu0 %v823
        %v848 = vpop.f32.mrf.mxu0
        %v849 = vadd.f32 %v836, %v848
        %v850 = vpop.f32.mrf.mxu0
        %851 = vdwg.mxu0
        %v852 = vrcp.pop %v849
        %v853 = vperm.slane %v852, 2
        %v854 = vmul.f32 %v849, %v853
        %v855 = vpack.c.bf16 %v854, %v854
        %v856 = vld [vmem:[%s3] sm:$0x3]
        %v857 = vld [vmem:[%s4] sm:$0xf]
        %859 = vset.pattern.permute.xlu0 0
        %860 = vperm.xlu0 %859, %v857
        %v861 = vpop.permute.xlu0 %860
        %v864 = vsel %vm531, %v856, 0
        %v867 = vsel %vm556, %v855, 0
        %869 = vmatpush.bf16.msra.mxu0 0
        %870 = vmatpush.bf16.msra.mxu0 0
        %871 = vmatpush.bf16.msra.mxu0 0
        %872 = vmatpush.bf16.msra.mxu0 0
        %873 = vmatpush.bf16.msra.mxu0 0
        %874 = vmatpush.bf16.msra.mxu0 0
        %875 = vmatpush.bf16.msra.mxu0 0
        %876 = vmatpush.bf16.msra.mxu0 %v867
        %877 = vmatmul.bf16.gmra.mxu0 %v864
        %v878 = vpop.f32.mrf.mxu0
        %v879 = vadd.f32 %v861, %v878
        %v880 = vpop.f32.mrf.mxu0
        %881 = vdwg.mxu0
        %s882 = sshra.s32 %s465, 7
        %s883 = sand.u32 %s465, 127
        %s884 = smul.addr %s882, 4
        %s885 = scalar_lea.vmem %s229, %s884 [#allocation5]
        %v886 = vld [vmem:[%s885] sm:$0xf]
        %v887 = vadd.f32 %v879, %v886
        %888 = vst [vmem:[%s256] sm:$0xf] %v887
        %s889 = sand.u32 %s154, 1
        %s890 = scalar_lea.sflag [#allocation7], %s889
        %s891 = sand.u32 %s154, 1
        %s892 = smul.addr %s891, 4
        %s893 = scalar_lea.vmem [#allocation8], %s892
        // Predicated region
        $region49: #{tpu_custom_call.1} parent=39 // pred_check
          %p894 = pneg %p164
        $region50: #{tpu_custom_call.1} parent=39 // pred_check_branch
          %896 = sbr.rel (%p894) target = $region52
        $region51: #{tpu_custom_call.1} parent=39 // pred_region
          %898 = vsyncadd %s890, 0
          %s899 = smul.addr %s26, 2
          %s900 = sadd.s32 %s27, %s899
          %s901 = smul.addr %s900, 4
          %s902 = scalar_lea.hbm %s5, %s901
          %s904 = sshll.u32 %s893, 4
          %s905 = int_to_ptr.vmem [resolvable:$true] %s904
          %s906 = sshll.u32 %s902, 4
          %s907 = int_to_ptr.hbm [resolvable:$true] %s906
          %909 = dma.vmem_to_hbm [thread:$0]  %s905, 64, %s907, %s890
        $region52: #{tpu_custom_call.1} parent=39 // pred_fallthru
          _
      $region40: #{tpu_custom_call.1} parent=5 // pred_fallthru
        _
      %p910 = scmp.le.s32.totalorder 2, %s17
      // Predicated region
      $region53: #{tpu_custom_call.1} parent=5 // pred_check
        %p911 = pneg %p910
      $region54: #{tpu_custom_call.1} parent=5 // pred_check_branch
        %913 = sbr.rel (%p911) target = $region56
      $region55: #{tpu_custom_call.1} parent=5 // pred_region
        %s914 = ssub.s32 %s17, 2
        // Predicated region
        $region57: #{tpu_custom_call.1} parent=55 // pred_check
          %p915 = pneg %p170
        $region58: #{tpu_custom_call.1} parent=55 // pred_check_branch
          %917 = sbr.rel (%p915) target = $region60
        $region59: #{tpu_custom_call.1} parent=55 // pred_region
          %s918 = sand.u32 %s155, 1
          %s919 = scalar_lea.sflag [#allocation7], %s918
          %s920 = sand.u32 %s155, 1
          %s921 = smul.addr %s920, 4
          %s922 = scalar_lea.vmem [#allocation8], %s921
          %924 = dma.done %s919, 64
        $region60: #{tpu_custom_call.1} parent=55 // pred_fallthru
          _
      $region56: #{tpu_custom_call.1} parent=5 // pred_fallthru
        _
    $region6: #{tpu_custom_call.1} parent=1 // loop_footer
      %s21 = sadd.s32 1, %s17
    $region7: #{tpu_custom_call.1} parent=1 // loop_footer_branch
      %16 = sbr.rel target = $region3
    $region8: #{tpu_custom_call.1} parent=1 // loop_exit
      _
    %925 = vsyncpa [#allocation6], 1
    %s926 = scalar_lea.sflag [#allocation6], 1
    %927 = vsyncpa %s926, 1
    %928 = vsyncpa [#allocation7], 1
    %s929 = scalar_lea.sflag [#allocation7], 1
    %930 = vsyncpa %s929, 1

</llo_original>
